<compile_context>
chip_gen: v5e
topology: v5e:2x2
jax: 0.10.0
libtpu: 0.0.40
codegen_flags: <defaults>
</compile_context>

<pallas_src>
import jax
import jax.numpy as jnp
from jax import lax
from jax.experimental import pallas as pl
from jax.experimental.pallas import tpu as pltpu


def cross_attention_kernel(x1_ref, x2_ref, wq_ref, bq_ref, wkv_ref, bkv_ref,
                           o_ref, kv_ref):
    # Shapes (batch dim squeezed away via block_shape=None):
    #   x1_ref : [C, TQ]              query-position tile
    #   x2_ref : [C, N]               all key/value positions
    #   wq_ref : [C_pad, C]           scale-folded, zero-padded Q weights
    #   bq_ref : [C_pad, 1]
    #   wkv_ref: [C_pad + C + 1, C]   packed K / V / ones-row weights
    #   bkv_ref: [C_pad + C + 1, 1]   packed biases (last row == 1.0)
    #   o_ref  : [C, TQ]
    #   kv_ref : [C_pad + C + 1, N]   VMEM scratch, carried across query tiles
    C = o_ref.shape[0]
    c_pad = kv_ref.shape[0] - (C + 1)
    qi = pl.program_id(1)

    @pl.when(qi == 0)
    def _():
        # One packed 1x1-conv matmul: rows [0:C] = K, [c_pad:c_pad+C] = V,
        # last row = ones(N) (zero weights + bias 1.0) for the fused softmax
        # denominator.  Computed once per batch image and reused for every
        # query tile (the q grid axis is "arbitrary").
        kv_ref[...] = (jnp.dot(wkv_ref[...], x2_ref[...],
                               preferred_element_type=jnp.float32)
                       + bkv_ref[...])

    # Q projection (attention scale already folded into wq/bq); padded rows
    # are exact zeros.
    q = (jnp.dot(wq_ref[...], x1_ref[...], preferred_element_type=jnp.float32)
         + bq_ref[...])                                            # [C_pad, TQ]

    k = kv_ref[:c_pad, :]                                          # [C_pad, N]
    v_aug = kv_ref[c_pad:, :]                                      # [C + 1, N]

    # scores[i, j] = sum_c q[c, i] * k[c, j]  (padded rows contribute 0).
    scores = lax.dot_general(q, k,
                             dimension_numbers=(((0,), (0,)), ((), ())),
                             preferred_element_type=jnp.float32)   # [TQ, N]

    # Numerically-stable un-normalized softmax weights.
    p = jnp.exp(scores - jnp.max(scores, axis=-1, keepdims=True))  # [TQ, N]
    # TODO(synk): on v6e/v7x `p` (and the exp input) could be cast to bf16
    # (bf16 EUP/MXU paths, half the VMEM traffic) — kept f32 here to preserve
    # the 1e-3 validation tolerance and v5e behaviour.

    # out_aug[c, i] = sum_j v_aug[c, j] * p[i, j]; the ones row of v_aug
    # yields the softmax denominator for free from the MXU, already [1, TQ].
    out_aug = lax.dot_general(v_aug, p,
                              dimension_numbers=(((1,), (1,)), ((), ())),
                              preferred_element_type=jnp.float32)  # [C+1, TQ]

    inv_denom = pl.reciprocal(out_aug[C:C + 1, :], approx=True)    # [1, TQ]
    o_ref[...] = (out_aug[:C, :] * inv_denom).astype(o_ref.dtype)


def _pick_tile_q(n):
    """Largest multiple-of-128 divisor of n whose f32 [tile_q, n] score block
    stays under ~4 MiB (well inside the default scoped VMEM on v5e/v6e/v7x,
    leaving headroom for the double-buffered input/output tiles)."""
    if n <= 128 or n % 128 != 0:
        return n
    budget_rows = (4 * 1024 * 1024) // (4 * n)
    best = 128
    t = 128
    while t <= n:
        if n % t == 0 and t <= budget_rows:
            best = t
        t += 128
    return best


def cross_attention(x1, x2, wq, bq, wk, bk, wv, bv):
    """x1, x2: [B, C, H, W] float32.  Conv weights wq/wk/wv: [C, C, 1, 1], biases: [C]."""
    B, C, H, W = x1.shape
    N = H * W
    scale = jnp.float32(C) ** jnp.float32(-0.5)

    # NCHW -> channel-major [B, C, N]: pure reshape, no HBM transpose pass.
    x1_cn = x1.reshape(B, C, N)
    x2_cn = x2.reshape(B, C, N)

    # Channel rows padded to a sublane multiple so in-kernel slices of the
    # packed projection are tile-aligned; padded rows are exact zeros.
    c_pad = ((C + 7) // 8) * 8
    kv_rows = c_pad + C + 1

    # Q projection with the attention scale folded in:  (scale*Wq) x + scale*bq.
    wq_m = jnp.zeros((c_pad, C), jnp.float32).at[:C].set(wq.reshape(C, C) * scale)
    bq_m = jnp.zeros((c_pad, 1), jnp.float32).at[:C, 0].set(bq * scale)

    # Packed K / V / ones-row projection (single matmul in-kernel).
    wkv_m = (jnp.zeros((kv_rows, C), jnp.float32)
             .at[:C].set(wk.reshape(C, C))
             .at[c_pad:c_pad + C].set(wv.reshape(C, C)))
    bkv_m = (jnp.zeros((kv_rows, 1), jnp.float32)
             .at[:C, 0].set(bk)
             .at[c_pad:c_pad + C, 0].set(bv)
             .at[kv_rows - 1, 0].set(1.0))          # ones row -> softmax denom

    tile_q = _pick_tile_q(N)
    n_q = N // tile_q

    x1_spec = pl.BlockSpec((None, C, tile_q), lambda b, qi: (b, 0, qi))
    x2_spec = pl.BlockSpec((None, C, N), lambda b, qi: (b, 0, 0))
    o_spec = pl.BlockSpec((None, C, tile_q), lambda b, qi: (b, 0, qi))
    wq_spec = pl.BlockSpec((c_pad, C), lambda b, qi: (0, 0))
    bq_spec = pl.BlockSpec((c_pad, 1), lambda b, qi: (0, 0))
    wkv_spec = pl.BlockSpec((kv_rows, C), lambda b, qi: (0, 0))
    bkv_spec = pl.BlockSpec((kv_rows, 1), lambda b, qi: (0, 0))

    # TODO(synk): for very large N (where even a 128-row score tile exceeds the
    # ~4 MiB budget) switch to flash-style streamed K/V tiles with m/l/acc
    # scratch instead of the monolithic [tile_q, N] score block.
    out_cn = pl.pallas_call(
        cross_attention_kernel,
        out_shape=jax.ShapeDtypeStruct((B, C, N), jnp.float32),
        grid_spec=pltpu.PrefetchScalarGridSpec(
            num_scalar_prefetch=0,
            grid=(B, n_q),
            in_specs=[x1_spec, x2_spec, wq_spec, bq_spec, wkv_spec, bkv_spec],
            out_specs=o_spec,
            scratch_shapes=[pltpu.VMEM((kv_rows, N), jnp.float32)]),
        compiler_params=pltpu.CompilerParams(
            # Batch is megacore-sharded; the query axis carries the K/V
            # scratch across tiles so it must stay "arbitrary".
            dimension_semantics=("parallel", "arbitrary")),
    )(x1_cn, x2_cn, wq_m, bq_m, wkv_m, bkv_m)

    # [B, C, N] -> [B, C, H, W]: pure reshape, no transpose.
    return out_cn.reshape(B, C, H, W)


def reference_cross_attention(x1, x2, wq, bq, wk, bk, wv, bv):
    """Pure-JAX reference matching the PyTorch forward exactly (NCHW)."""
    B, C, H, W = x1.shape
    N = H * W

    def conv1x1(x, w, b):
        xr = x.reshape(B, C, N)                               # [B, C_in, N]
        y = jnp.einsum('oc,bcn->bon', w.reshape(C, C), xr)    # [B, C_out, N]
        return y + b[None, :, None]

    q = conv1x1(x1, wq, bq)   # [B, C, N]
    k = conv1x1(x2, wk, bk)
    v = conv1x1(x2, wv, bv)
    scale = C ** (-0.5)
    attn = jnp.einsum('bcn,bcm->bnm', q, k) * scale           # [B, N, N]
    attn = jax.nn.softmax(attn, axis=-1)
    out = jnp.einsum('bcn,bmn->bcm', v, attn)                 # v @ attn^T -> [B, C, N]
    return out.reshape(B, C, H, W)


if __name__ == "__main__":
    B, C, H, W = 2, 4, 16, 16

    key = jax.random.PRNGKey(0)
    keys = jax.random.split(key, 8)
    x1 = jax.random.normal(keys[0], (B, C, H, W), dtype=jnp.float32)
    x2 = jax.random.normal(keys[1], (B, C, H, W), dtype=jnp.float32)

    # Deterministic parameters (PyTorch Conv2d(dim, dim, 1) shapes).
    wq = jax.random.normal(keys[2], (C, C, 1, 1), dtype=jnp.float32) * 0.2
    wk = jax.random.normal(keys[3], (C, C, 1, 1), dtype=jnp.float32) * 0.2
    wv = jax.random.normal(keys[4], (C, C, 1, 1), dtype=jnp.float32) * 0.2
    bq = jax.random.normal(keys[5], (C,), dtype=jnp.float32) * 0.1
    bk = jax.random.normal(keys[6], (C,), dtype=jnp.float32) * 0.1
    bv = jax.random.normal(keys[7], (C,), dtype=jnp.float32) * 0.1

    out = cross_attention(x1, x2, wq, bq, wk, bk, wv, bv)
    out = jax.block_until_ready(out)

    ref = reference_cross_attention(x1, x2, wq, bq, wk, bk, wv, bv)
    assert out.shape == (B, C, H, W)
    # Tolerance accounts for the EUP approximate reciprocal on the fused
    # softmax denominator; any layout/semantics bug would produce O(1) errors.
    assert jnp.allclose(out, ref, atol=1e-3, rtol=1e-3), "mismatch vs reference"

    print("KERNEL_OK")
</pallas_src>

<mosaic_0001>
module attributes {stable_mosaic.version = 11 : i64} {
  func.func @cross_attention_kernel(%arg0: i32, %arg1: i32, %arg2: memref<1x4x256xf32, #tpu.memory_space<vmem>>, %arg3: memref<1x4x256xf32, #tpu.memory_space<vmem>>, %arg4: memref<8x4xf32, #tpu.memory_space<vmem>>, %arg5: memref<8x1xf32, #tpu.memory_space<vmem>>, %arg6: memref<13x4xf32, #tpu.memory_space<vmem>>, %arg7: memref<13x1xf32, #tpu.memory_space<vmem>>, %arg8: memref<1x4x256xf32, #tpu.memory_space<vmem>>, %arg9: memref<13x256xf32, #tpu.memory_space<vmem>>) attributes {dimension_semantics = [#tpu.dimension_semantics<parallel>, #tpu.dimension_semantics<arbitrary>], iteration_bounds = array<i64: 2, 1>, scalar_prefetch = 0 : i64, scratch_operands = 1 : i64, tpu.core_type = #tpu.core_type<tc>, window_params = [{transform_indices = @transform_0, window_bounds = array<i64: 1, 4, 256>}, {transform_indices = @transform_1, window_bounds = array<i64: 1, 4, 256>}, {pipeline_mode = #tpu.pipeline_mode<synchronous>, transform_indices = @transform_2, window_bounds = array<i64: 8, 4>}, {pipeline_mode = #tpu.pipeline_mode<synchronous>, transform_indices = @transform_3, window_bounds = array<i64: 8, 1>}, {pipeline_mode = #tpu.pipeline_mode<synchronous>, transform_indices = @transform_4, window_bounds = array<i64: 13, 4>}, {pipeline_mode = #tpu.pipeline_mode<synchronous>, transform_indices = @transform_5, window_bounds = array<i64: 13, 1>}, {transform_indices = @transform_6, window_bounds = array<i64: 1, 4, 256>}]} {
    %c0_i32 = arith.constant 0 : i32
    %0 = arith.cmpi eq, %arg1, %c0_i32 : i32
    %1 = arith.extui %0 : i1 to i32
    %c0_i32_0 = arith.constant 0 : i32
    %2 = arith.cmpi ne, %1, %c0_i32_0 : i32
    scf.if %2 {
      %c0_16 = arith.constant 0 : index
      %c0_17 = arith.constant 0 : index
      %27 = vector.load %arg6[%c0_16, %c0_17] : memref<13x4xf32, #tpu.memory_space<vmem>>, vector<13x4xf32>
      %c0_18 = arith.constant 0 : index
      %c0_19 = arith.constant 0 : index
      %c0_20 = arith.constant 0 : index
      %28 = vector.load %arg3[%c0_18, %c0_19, %c0_20] : memref<1x4x256xf32, #tpu.memory_space<vmem>>, vector<1x4x256xf32>
      %29 = vector.shape_cast %28 : vector<1x4x256xf32> to vector<4x256xf32>
      %cst_21 = arith.constant dense<0.000000e+00> : vector<13x256xf32>
      %30 = tpu.matmul %27, %29, %cst_21 {dimension_numbers = #tpu.dot_dimension_numbers<[1], [0], [0], [1], [0, 0, 1, 1], [], []>} : vector<13x4xf32>, vector<4x256xf32>, vector<13x256xf32> -> vector<13x256xf32>
      %c0_22 = arith.constant 0 : index
      %c0_23 = arith.constant 0 : index
      %31 = vector.load %arg7[%c0_22, %c0_23] : memref<13x1xf32, #tpu.memory_space<vmem>>, vector<13x1xf32>
      %32 = vector.broadcast %31 : vector<13x1xf32> to vector<13x256xf32>
      %33 = arith.addf %30, %32 : vector<13x256xf32>
      %c0_24 = arith.constant 0 : index
      %c0_25 = arith.constant 0 : index
      %34 = vector.load %arg9[%c0_24, %c0_25] : memref<13x256xf32, #tpu.memory_space<vmem>>, vector<13x256xf32>
      tpu.vector_store %arg9[%c0_24, %c0_25], %33 {strides = array<i32>} : memref<13x256xf32, #tpu.memory_space<vmem>>, vector<13x256xf32>,
    } else {
    }
    %c0 = arith.constant 0 : index
    %c0_1 = arith.constant 0 : index
    %3 = vector.load %arg4[%c0, %c0_1] : memref<8x4xf32, #tpu.memory_space<vmem>>, vector<8x4xf32>
    %c0_2 = arith.constant 0 : index
    %c0_3 = arith.constant 0 : index
    %c0_4 = arith.constant 0 : index
    %4 = vector.load %arg2[%c0_2, %c0_3, %c0_4] : memref<1x4x256xf32, #tpu.memory_space<vmem>>, vector<1x4x256xf32>
    %5 = vector.shape_cast %4 : vector<1x4x256xf32> to vector<4x256xf32>
    %cst = arith.constant dense<0.000000e+00> : vector<8x256xf32>
    %6 = tpu.matmul %3, %5, %cst {dimension_numbers = #tpu.dot_dimension_numbers<[1], [0], [0], [1], [0, 0, 1, 1], [], []>} : vector<8x4xf32>, vector<4x256xf32>, vector<8x256xf32> -> vector<8x256xf32>
    %c0_5 = arith.constant 0 : index
    %c0_6 = arith.constant 0 : index
    %7 = vector.load %arg5[%c0_5, %c0_6] : memref<8x1xf32, #tpu.memory_space<vmem>>, vector<8x1xf32>
    %8 = vector.broadcast %7 : vector<8x1xf32> to vector<8x256xf32>
    %9 = arith.addf %6, %8 : vector<8x256xf32>
    %c0_7 = arith.constant 0 : index
    %c0_8 = arith.constant 0 : index
    %10 = vector.load %arg9[%c0_7, %c0_8] : memref<13x256xf32, #tpu.memory_space<vmem>>, vector<8x256xf32>
    %c8 = arith.constant 8 : index
    %c0_9 = arith.constant 0 : index
    %11 = vector.load %arg9[%c8, %c0_9] : memref<13x256xf32, #tpu.memory_space<vmem>>, vector<5x256xf32>
    %cst_10 = arith.constant dense<0.000000e+00> : vector<256x256xf32>
    %12 = tpu.matmul %9, %10, %cst_10 {dimension_numbers = #tpu.dot_dimension_numbers<[0], [0], [1], [1], [0, 1, 1, 1], [], []>} : vector<8x256xf32>, vector<8x256xf32>, vector<256x256xf32> -> vector<256x256xf32>
    %cst_11 = arith.constant dense<0xFF800000> : vector<256xf32>
    %13 = vector.multi_reduction <maximumf>, %12, %cst_11 [1] : vector<256x256xf32> to vector<256xf32>
    %14 = vector.shape_cast %13 : vector<256xf32> to vector<256x1xf32>
    %15 = vector.broadcast %14 : vector<256x1xf32> to vector<256x256xf32>
    %16 = arith.subf %12, %15 : vector<256x256xf32>
    %17 = math.exp %16 : vector<256x256xf32>
    %cst_12 = arith.constant dense<0.000000e+00> : vector<5x256xf32>
    %18 = tpu.matmul %11, %17, %cst_12 {dimension_numbers = #tpu.dot_dimension_numbers<[1], [1], [0], [0], [0, 0, 1, 0], [], []>} : vector<5x256xf32>, vector<256x256xf32>, vector<5x256xf32> -> vector<5x256xf32>
    %19 = vector.extract_strided_slice %18 {offsets = [4, 0], sizes = [1, 256], strides = [1, 1]} : vector<5x256xf32> to vector<1x256xf32>
    %20 = tpu.reciprocal %19 {approx = true} : vector<1x256xf32> -> vector<1x256xf32>
    %21 = vector.extract_strided_slice %18 {offsets = [0, 0], sizes = [4, 256], strides = [1, 1]} : vector<5x256xf32> to vector<4x256xf32>
    %22 = vector.broadcast %20 : vector<1x256xf32> to vector<4x256xf32>
    %23 = arith.mulf %21, %22 : vector<4x256xf32>
    %c0_13 = arith.constant 0 : index
    %c0_14 = arith.constant 0 : index
    %c0_15 = arith.constant 0 : index
    %24 = vector.load %arg8[%c0_13, %c0_14, %c0_15] : memref<1x4x256xf32, #tpu.memory_space<vmem>>, vector<1x4x256xf32>
    %25 = vector.shape_cast %24 : vector<1x4x256xf32> to vector<4x256xf32>
    %26 = vector.shape_cast %23 : vector<4x256xf32> to vector<1x4x256xf32>
    tpu.vector_store %arg8[%c0_13, %c0_14, %c0_15], %26 {strides = array<i32>} : memref<1x4x256xf32, #tpu.memory_space<vmem>>, vector<1x4x256xf32>,
    return
  }
  func.func @transform_0(%arg0: i32, %arg1: i32) -> (i32, i32, i32) {
    %c0_i32 = arith.constant 0 : i32
    %c0_i32_0 = arith.constant 0 : i32
    return %arg0, %c0_i32, %arg1 : i32, i32, i32
  }
  func.func @transform_1(%arg0: i32, %arg1: i32) -> (i32, i32, i32) {
    %c0_i32 = arith.constant 0 : i32
    %c0_i32_0 = arith.constant 0 : i32
    %c0_i32_1 = arith.constant 0 : i32
    return %arg0, %c0_i32, %c0_i32_0 : i32, i32, i32
  }
  func.func @transform_2(%arg0: i32, %arg1: i32) -> (i32, i32) {
    %c0_i32 = arith.constant 0 : i32
    %c0_i32_0 = arith.constant 0 : i32
    %c0_i32_1 = arith.constant 0 : i32
    return %c0_i32, %c0_i32_0 : i32, i32
  }
  func.func @transform_3(%arg0: i32, %arg1: i32) -> (i32, i32) {
    %c0_i32 = arith.constant 0 : i32
    %c0_i32_0 = arith.constant 0 : i32
    %c0_i32_1 = arith.constant 0 : i32
    return %c0_i32, %c0_i32_0 : i32, i32
  }
  func.func @transform_4(%arg0: i32, %arg1: i32) -> (i32, i32) {
    %c0_i32 = arith.constant 0 : i32
    %c0_i32_0 = arith.constant 0 : i32
    %c0_i32_1 = arith.constant 0 : i32
    return %c0_i32, %c0_i32_0 : i32, i32
  }
  func.func @transform_5(%arg0: i32, %arg1: i32) -> (i32, i32) {
    %c0_i32 = arith.constant 0 : i32
    %c0_i32_0 = arith.constant 0 : i32
    %c0_i32_1 = arith.constant 0 : i32
    return %c0_i32, %c0_i32_0 : i32, i32
  }
  func.func @transform_6(%arg0: i32, %arg1: i32) -> (i32, i32, i32) {
    %c0_i32 = arith.constant 0 : i32
    %c0_i32_0 = arith.constant 0 : i32
    return %arg0, %c0_i32, %arg1 : i32, i32, i32
  }
}

</mosaic_0001>

<llo_original>
// kernel: tpu_custom_call.1
$region0: #{tpu_custom_call.1}
  #allocation0 [shape = 'u32[]', space=smem, size = 0x4, offset = 0x4, fixed_abs, tag = 'smem constant byte address 0x4 - core index']
  #allocation1 [shape = 'u32[72,128]{1,0:T(1,128)}', space=vmem, size = 0x9000, scoped, tag = 'internal scratch']
  #allocation2 [shape = 'f32[13,256]{1,0:T(8,128)}', space=vmem, size = 0x4000, scoped, tag = 'scratch operand']
  %s0 = inlined_call_operand.vmem [shape: f32[2,4,256], index: 0, kind: input, shape index: {}]
  %s1 = inlined_call_operand.vmem [shape: f32[2,4,256], index: 1, kind: input, shape index: {}]
  %s2 = inlined_call_operand.vmem [shape: f32[8,4], index: 2, kind: input, shape index: {}]
  %s3 = inlined_call_operand.vmem [shape: f32[8,1], index: 3, kind: input, shape index: {}]
  %s4 = inlined_call_operand.vmem [shape: f32[13,4], index: 4, kind: input, shape index: {}]
  %s5 = inlined_call_operand.vmem [shape: f32[13,1], index: 5, kind: input, shape index: {}]
  %s6 = inlined_call_operand.hbm [shape: f32[2,4,256], index: 6, kind: output, shape index: {}]
  %s7 = sld [smem:[#allocation0]]
  $region61: #{tpu_custom_call.1} parent=0
    _
  %s9 = ssub.s32 1, %s7
  %s10 = scalar_select 0, %s9, %s7
  $region1: #{tpu_custom_call.1} parent=0
    #allocation3 [shape = 'u8[8192]{0}', space=vmem, size = 0x2000, scoped, tag = 'output window, operand 0']
    #allocation4 [shape = 's32[2]{0}', space=sflag, size = 0x8, scoped, tag = 'scoped memory for tpu_custom_call.1']
    %11 = vsyncpa [#allocation4], 0
    %s12 = scalar_lea.sflag [#allocation4], 1
    %13 = vsyncpa %s12, 0
    loop: start=0, step=1, limit=4
    $region2: #{tpu_custom_call.1} parent=1 // loop_pre_header
      _
    $region3: #{tpu_custom_call.1} parent=1 // loop_header
      %s15 = sphi 0, %s19
      %p16 = scmp.ge.s32.totalorder %s15, 4
      %s22 = sphi 0, %s34
      %s23 = sphi 0, %s30
      %s24 = sphi 0, %s22
      %s25 = sphi 0, %s23
      %s26 = sphi 0, %s24
      %s27 = sphi 0, %s25
      %s39 = sphi 0, %s41
      %s42 = sphi 0, %s39
      %s43 = sphi 0, %s42
      %s59 = sphi 0, %s43
      %s65 = sphi 0, %s67
      %s68 = sphi 0, %s65
      %s69 = sphi 0, %s68
      %s85 = sphi 0, %s69
      %s89 = sphi 0, %s89
      %s91 = sphi 0, %s89
      %s92 = sphi 0, %s91
      %s106 = sphi 0, %s92
      %s110 = sphi 0, %s110
      %s112 = sphi 0, %s110
      %s113 = sphi 0, %s112
      %s127 = sphi 0, %s113
      %s131 = sphi 0, %s131
      %s133 = sphi 0, %s131
      %s134 = sphi 0, %s133
      %s148 = sphi 0, %s134
      %s152 = sphi 0, %s152
      %s154 = sphi 0, %s152
      %s155 = sphi 0, %s154
      %s169 = sphi 0, %s155
      %s177 = sphi 0, %s179
      %s180 = sphi 0, %s177
      %s181 = sphi 0, %s180
      %s197 = sphi 0, %s181
    $region4: #{tpu_custom_call.1} parent=1 // loop_header_branch
      %18 = sbr.rel (%p16) target = $region8
    $region5: #{tpu_custom_call.1} parent=1 // loop_body
      %s20 = ssub.s32 %s15, 1
      %s21 = ssub.s32 %s15, 2
      %s28 = sadd.s32 1, %s23
      %p29 = scmp.ge.s32.totalorder %s28, 1
      %s30 = scalar_select %p29, 0, %s28
      %s31 = sadd.s32 1, %s22
      %s32 = scalar_select %p29, %s31, %s22
      %p33 = scmp.ge.s32.totalorder %s32, 2
      %s34 = scalar_select %p33, 0, %s32
      %s35 = ssub.s32 %s22, %s34
      %s36 = ssub.s32 %s23, %s30
      %s37 = sor.u32 %s35, %s36
      %p38 = scmp.eq.s32.totalorder %s37, 0
      %s40 = sadd.s32 %s39, 1
      %s41 = scalar_select %p38, %s39, %s40
      %p44 = pneg %p38
      %p45 = scmp.eq.s32.totalorder %s15, 1
      %p46 = por %p44, %p45
      %p47 = scmp.ne.s32.totalorder %s39, %s42
      %p48 = scmp.eq.s32.totalorder %s15, 0
      %p49 = por %p47, %p48
      %p50 = scmp.ne.s32.totalorder %s39, %s42
      %p51 = scmp.eq.s32.totalorder %s20, 1
      %p52 = por %p50, %p51
      %p53 = scmp.ne.s32.totalorder %s42, %s43
      %p54 = scmp.eq.s32.totalorder %s20, 0
      %p55 = por %p53, %p54
      %p56 = scmp.ne.s32.totalorder %s42, %s43
      %p57 = scmp.eq.s32.totalorder %s21, 1
      %p58 = por %p56, %p57
      %p60 = scmp.ne.s32.totalorder %s43, %s59
      %p61 = scmp.eq.s32.totalorder %s21, 0
      %p62 = por %p60, %p61
      %s63 = ssub.s32 %s22, %s34
      %p64 = scmp.eq.s32.totalorder %s63, 0
      %s66 = sadd.s32 %s65, 1
      %s67 = scalar_select %p64, %s65, %s66
      %p70 = pneg %p64
      %p71 = scmp.eq.s32.totalorder %s15, 1
      %p72 = por %p70, %p71
      %p73 = scmp.ne.s32.totalorder %s65, %s68
      %p74 = scmp.eq.s32.totalorder %s15, 0
      %p75 = por %p73, %p74
      %p76 = scmp.ne.s32.totalorder %s65, %s68
      %p77 = scmp.eq.s32.totalorder %s20, 1
      %p78 = por %p76, %p77
      %p79 = scmp.ne.s32.totalorder %s68, %s69
      %p80 = scmp.eq.s32.totalorder %s20, 0
      %p81 = por %p79, %p80
      %p82 = scmp.ne.s32.totalorder %s68, %s69
      %p83 = scmp.eq.s32.totalorder %s21, 1
      %p84 = por %p82, %p83
      %p86 = scmp.ne.s32.totalorder %s69, %s85
      %p87 = scmp.eq.s32.totalorder %s21, 0
      %p88 = por %p86, %p87
      %s90 = sadd.s32 %s89, 1
      %p93 = scmp.eq.s32.totalorder %s15, 1
      %p94 = scmp.ne.s32.totalorder %s89, %s91
      %p95 = scmp.eq.s32.totalorder %s15, 0
      %p96 = por %p94, %p95
      %p97 = scmp.ne.s32.totalorder %s89, %s91
      %p98 = scmp.eq.s32.totalorder %s20, 1
      %p99 = por %p97, %p98
      %p100 = scmp.ne.s32.totalorder %s91, %s92
      %p101 = scmp.eq.s32.totalorder %s20, 0
      %p102 = por %p100, %p101
      %p103 = scmp.ne.s32.totalorder %s91, %s92
      %p104 = scmp.eq.s32.totalorder %s21, 1
      %p105 = por %p103, %p104
      %p107 = scmp.ne.s32.totalorder %s92, %s106
      %p108 = scmp.eq.s32.totalorder %s21, 0
      %p109 = por %p107, %p108
      %s111 = sadd.s32 %s110, 1
      %p114 = scmp.eq.s32.totalorder %s15, 1
      %p115 = scmp.ne.s32.totalorder %s110, %s112
      %p116 = scmp.eq.s32.totalorder %s15, 0
      %p117 = por %p115, %p116
      %p118 = scmp.ne.s32.totalorder %s110, %s112
      %p119 = scmp.eq.s32.totalorder %s20, 1
      %p120 = por %p118, %p119
      %p121 = scmp.ne.s32.totalorder %s112, %s113
      %p122 = scmp.eq.s32.totalorder %s20, 0
      %p123 = por %p121, %p122
      %p124 = scmp.ne.s32.totalorder %s112, %s113
      %p125 = scmp.eq.s32.totalorder %s21, 1
      %p126 = por %p124, %p125
      %p128 = scmp.ne.s32.totalorder %s113, %s127
      %p129 = scmp.eq.s32.totalorder %s21, 0
      %p130 = por %p128, %p129
      %s132 = sadd.s32 %s131, 1
      %p135 = scmp.eq.s32.totalorder %s15, 1
      %p136 = scmp.ne.s32.totalorder %s131, %s133
      %p137 = scmp.eq.s32.totalorder %s15, 0
      %p138 = por %p136, %p137
      %p139 = scmp.ne.s32.totalorder %s131, %s133
      %p140 = scmp.eq.s32.totalorder %s20, 1
      %p141 = por %p139, %p140
      %p142 = scmp.ne.s32.totalorder %s133, %s134
      %p143 = scmp.eq.s32.totalorder %s20, 0
      %p144 = por %p142, %p143
      %p145 = scmp.ne.s32.totalorder %s133, %s134
      %p146 = scmp.eq.s32.totalorder %s21, 1
      %p147 = por %p145, %p146
      %p149 = scmp.ne.s32.totalorder %s134, %s148
      %p150 = scmp.eq.s32.totalorder %s21, 0
      %p151 = por %p149, %p150
      %s153 = sadd.s32 %s152, 1
      %p156 = scmp.eq.s32.totalorder %s15, 1
      %p157 = scmp.ne.s32.totalorder %s152, %s154
      %p158 = scmp.eq.s32.totalorder %s15, 0
      %p159 = por %p157, %p158
      %p160 = scmp.ne.s32.totalorder %s152, %s154
      %p161 = scmp.eq.s32.totalorder %s20, 1
      %p162 = por %p160, %p161
      %p163 = scmp.ne.s32.totalorder %s154, %s155
      %p164 = scmp.eq.s32.totalorder %s20, 0
      %p165 = por %p163, %p164
      %p166 = scmp.ne.s32.totalorder %s154, %s155
      %p167 = scmp.eq.s32.totalorder %s21, 1
      %p168 = por %p166, %p167
      %p170 = scmp.ne.s32.totalorder %s155, %s169
      %p171 = scmp.eq.s32.totalorder %s21, 0
      %p172 = por %p170, %p171
      %s173 = ssub.s32 %s22, %s34
      %s174 = ssub.s32 %s23, %s30
      %s175 = sor.u32 %s173, %s174
      %p176 = scmp.eq.s32.totalorder %s175, 0
      %s178 = sadd.s32 %s177, 1
      %s179 = scalar_select %p176, %s177, %s178
      %p182 = pneg %p176
      %p183 = scmp.eq.s32.totalorder %s15, 1
      %p184 = por %p182, %p183
      %p185 = scmp.ne.s32.totalorder %s177, %s180
      %p186 = scmp.eq.s32.totalorder %s15, 0
      %p187 = por %p185, %p186
      %p188 = scmp.ne.s32.totalorder %s177, %s180
      %p189 = scmp.eq.s32.totalorder %s20, 1
      %p190 = por %p188, %p189
      %p191 = scmp.ne.s32.totalorder %s180, %s181
      %p192 = scmp.eq.s32.totalorder %s20, 0
      %p193 = por %p191, %p192
      %p194 = scmp.ne.s32.totalorder %s180, %s181
      %p195 = scmp.eq.s32.totalorder %s21, 1
      %p196 = por %p194, %p195
      %p198 = scmp.ne.s32.totalorder %s181, %s197
      %p199 = scmp.eq.s32.totalorder %s21, 0
      %p200 = por %p198, %p199
      %p201 = scmp.le.s32.totalorder 1, %s15
      %p202 = scmp.lt.s32.totalorder %s15, 3
      %p203 = pnand %p201, %p202
      %p204 = pneg %p203
      // Predicated region
      $region9: #{tpu_custom_call.1} parent=5 // pred_check
        _
      $region10: #{tpu_custom_call.1} parent=5 // pred_check_branch
        %206 = sbr.rel (%p203) target = $region12
      $region11: #{tpu_custom_call.1} parent=5 // pred_region
        %s207 = ssub.s32 %s15, 1
        // Predicated region
        $region13: #{tpu_custom_call.1} parent=11 // pred_check
          %p208 = pneg %p102
        $region14: #{tpu_custom_call.1} parent=11 // pred_check_branch
          %210 = sbr.rel (%p208) target = $region16
        $region15: #{tpu_custom_call.1} parent=11 // pred_region
          _
        $region16: #{tpu_custom_call.1} parent=11 // pred_fallthru
          _
        // Predicated region
        $region17: #{tpu_custom_call.1} parent=11 // pred_check
          %p211 = pneg %p123
        $region18: #{tpu_custom_call.1} parent=11 // pred_check_branch
          %213 = sbr.rel (%p211) target = $region20
        $region19: #{tpu_custom_call.1} parent=11 // pred_region
          _
        $region20: #{tpu_custom_call.1} parent=11 // pred_fallthru
          _
        // Predicated region
        $region21: #{tpu_custom_call.1} parent=11 // pred_check
          %p214 = pneg %p144
        $region22: #{tpu_custom_call.1} parent=11 // pred_check_branch
          %216 = sbr.rel (%p214) target = $region24
        $region23: #{tpu_custom_call.1} parent=11 // pred_region
          _
        $region24: #{tpu_custom_call.1} parent=11 // pred_fallthru
          _
        // Predicated region
        $region25: #{tpu_custom_call.1} parent=11 // pred_check
          %p217 = pneg %p165
        $region26: #{tpu_custom_call.1} parent=11 // pred_check_branch
          %219 = sbr.rel (%p217) target = $region28
        $region27: #{tpu_custom_call.1} parent=11 // pred_region
          _
        $region28: #{tpu_custom_call.1} parent=11 // pred_fallthru
          _
      $region12: #{tpu_custom_call.1} parent=5 // pred_fallthru
        _
      %p220 = scmp.lt.s32.totalorder %s15, 2
      // Predicated region
      $region29: #{tpu_custom_call.1} parent=5 // pred_check
        %p221 = pneg %p220
      $region30: #{tpu_custom_call.1} parent=5 // pred_check_branch
        %223 = sbr.rel (%p221) target = $region32
      $region31: #{tpu_custom_call.1} parent=5 // pred_region
        // Predicated region
        $region33: #{tpu_custom_call.1} parent=31 // pred_check
          %p224 = pneg %p49
        $region34: #{tpu_custom_call.1} parent=31 // pred_check_branch
          %226 = sbr.rel (%p224) target = $region36
        $region35: #{tpu_custom_call.1} parent=31 // pred_region
          %s227 = smul.u32 2, %s23
          %p228 = scmp.lt.s32.totalorder %s22, 1
          %s229 = scalar_select %p228, %s22, 1
          %p230 = scmp.lt.s32.totalorder %s227, 1
          %s231 = scalar_select %p230, %s227, 1
          %s232 = smul.addr %s229, 2
          %s233 = sadd.s32 %s231, %s232
          %s234 = smul.addr %s233, 4
          %s235 = scalar_lea.vmem %s0, %s234
          %s236 = smul.u32 2, %s23
        $region36: #{tpu_custom_call.1} parent=31 // pred_fallthru
          _
        // Predicated region
        $region37: #{tpu_custom_call.1} parent=31 // pred_check
          %p237 = pneg %p75
        $region38: #{tpu_custom_call.1} parent=31 // pred_check_branch
          %239 = sbr.rel (%p237) target = $region40
        $region39: #{tpu_custom_call.1} parent=31 // pred_region
          %p240 = scmp.lt.s32.totalorder %s22, 1
          %s241 = scalar_select %p240, %s22, 1
          %s242 = smul.addr %s241, 2
          %s243 = smul.addr %s242, 4
          %s244 = scalar_lea.vmem %s1, %s243
        $region40: #{tpu_custom_call.1} parent=31 // pred_fallthru
          _
      $region32: #{tpu_custom_call.1} parent=5 // pred_fallthru
        _
      %p245 = scmp.le.s32.totalorder 1, %s15
      %p246 = scmp.lt.s32.totalorder %s15, 3
      %p247 = pnand %p245, %p246
      %p248 = pneg %p247
      // Predicated region
      $region41: #{tpu_custom_call.1} parent=5 // pred_check
        _
      $region42: #{tpu_custom_call.1} parent=5 // pred_check_branch
        %250 = sbr.rel (%p247) target = $region44
      $region43: #{tpu_custom_call.1} parent=5 // pred_region
        %s251 = ssub.s32 %s15, 1
        %s252 = smul.u32 2, %s25
        %p253 = scmp.lt.s32.totalorder %s24, 1
        %s254 = scalar_select %p253, %s24, 1
        %p255 = scmp.lt.s32.totalorder %s252, 1
        %s256 = scalar_select %p255, %s252, 1
        %s257 = smul.addr %s254, 2
        %s258 = sadd.s32 %s256, %s257
        %s259 = smul.addr %s258, 4
        %s260 = scalar_lea.vmem %s0, %s259
        %p261 = pneg %p55
        %p262 = pneg %p52
        %p263 = scmp.lt.s32.totalorder %s24, 1
        %s264 = scalar_select %p263, %s24, 1
        %s265 = smul.addr %s264, 2
        %s266 = smul.addr %s265, 4
        %s267 = scalar_lea.vmem %s1, %s266
        %p268 = pneg %p81
        %p269 = pneg %p78
        %p270 = pneg %p102
        %p271 = pneg %p99
        %p272 = pneg %p123
        %p273 = pneg %p120
        %p274 = pneg %p144
        %p275 = pneg %p141
        %p276 = pneg %p165
        %p277 = pneg %p162
        %p278 = pneg %p193
        %p279 = pneg %p190
        %s280 = sand.u32 %s180, 1
        %s281 = scalar_lea.sflag [#allocation4], %s280
        %s282 = sand.u32 %s180, 1
        %s283 = smul.addr %s282, 8
        %s284 = scalar_lea.vmem [#allocation3], %s283
        %s285 = smul.u32 2, %s25
        %p286 = scmp.lt.s32.totalorder %s24, 1
        %s287 = scalar_select %p286, %s24, 1
        %p288 = scmp.lt.s32.totalorder %s285, 1
        %s289 = scalar_select %p288, %s285, 1
        %s290 = smul.addr %s287, 2
        %s291 = sadd.s32 %s289, %s290
        %s292 = smul.addr %s291, 4
        %s293 = scalar_lea.vmem %s0, %s292
        %s294 = smul.u32 2, %s25
        %p295 = scmp.lt.s32.totalorder %s24, 1
        %s296 = scalar_select %p295, %s24, 1
        %s297 = smul.addr %s296, 2
        %s298 = smul.addr %s297, 4
        %s299 = scalar_lea.vmem %s1, %s298
        %s300 = smul.u32 2, %s25
        %p301 = scmp.eq.s32.totalorder %s25, 0
        // Predicated region
        $region45: #{tpu_custom_call.1} parent=43 // pred_check
          %p302 = pneg %p301
        $region46: #{tpu_custom_call.1} parent=43 // pred_check_branch
          %304 = sbr.rel (%p302) target = $region48
        $region47: #{tpu_custom_call.1} parent=43 // pred_region
          %v305 = vld [vmem:[%s4] sm:$0xff]
          %v306 = vld [vmem:[%s4 + $0x8] sm:$0x1f]
          %v307 = vld [vmem:[%s299] sm:$0xff]
          %v308 = vld [vmem:[%s5] sm:$0xff]
          %v309 = vld [vmem:[%s5 + $0x8] sm:$0x1f]
          %311 = vset.pattern.permute.xlu0 0
          %312 = vperm.xlu0 %311, %v308
          %v313 = vpop.permute.xlu0 %312
          %316 = vset.pattern.permute.xlu0 0
          %317 = vperm.xlu0 %316, %v309
          %v318 = vpop.permute.xlu0 %317
          %321 = vst [vmem:[#allocation1] ss:$2 sm:$0xff] %v307
          %v322 = vld.sshfl [vmem:[#allocation1] sm:$0xff pattern:$0x75316420]
          %v323 = vld.sshfl [vmem:[#allocation1 + $0x8] sm:$0xff pattern:$0x75316420]
          %vm324 = vcmask 31744
          %v326 = vsel %vm324, %v305, 0
          %v329 = vsel %vm324, %v306, 0
          %vm331 = vcmask 1043456
          %v332 = vsel %vm331, %v322, 0
          %v334 = vsel %vm331, %v323, 0
          %336 = vmatpush.msra.mxu0 0.0
          %337 = vmatpush.msra.mxu0 0.0
          %338 = vmatpush.msra.mxu0 0.0
          %339 = vmatpush.msra.mxu0 0.0
          %340 = vmatpush.msra.mxu0 0.0
          %341 = vmatpush.msra.mxu0 0.0
          %342 = vmatpush.msra.mxu0 0.0
          %343 = vmatpush.msra.mxu0 0.0
          %344 = vmatpush.msra.mxu0 0.0
          %345 = vmatpush.msra.mxu0 0.0
          %346 = vmatpush.msra.mxu0 0.0
          %347 = vmatpush.msra.mxu0 0.0
          %348 = vmatpush.msra.mxu0 0.0
          %349 = vmatpush.msra.mxu0 0.0
          %350 = vmatpush.msra.mxu0 0.0
          %351 = vmatpush.msra.mxu0 %v332
          %352 = vmatmul.f32.gmra.mxu0 %v326
          %v353 = vpop.f32.mrf.mxu0
          %v354 = vadd.f32 %v313, %v353
          %355 = vmatmul.f32.gmra.mxu0 %v329
          %v356 = vpop.f32.mrf.mxu0
          %v357 = vadd.f32 %v318, %v356
          %358 = vdwg.mxu0
          %359 = vmatpush.msra.mxu0 0.0
          %360 = vmatpush.msra.mxu0 0.0
          %361 = vmatpush.msra.mxu0 0.0
          %362 = vmatpush.msra.mxu0 0.0
          %363 = vmatpush.msra.mxu0 0.0
          %364 = vmatpush.msra.mxu0 0.0
          %365 = vmatpush.msra.mxu0 0.0
          %366 = vmatpush.msra.mxu0 0.0
          %367 = vmatpush.msra.mxu0 0.0
          %368 = vmatpush.msra.mxu0 0.0
          %369 = vmatpush.msra.mxu0 0.0
          %370 = vmatpush.msra.mxu0 0.0
          %371 = vmatpush.msra.mxu0 0.0
          %372 = vmatpush.msra.mxu0 0.0
          %373 = vmatpush.msra.mxu0 0.0
          %374 = vmatpush.msra.mxu0 %v334
          %375 = vmatmul.f32.gmra.mxu0 %v326
          %v376 = vpop.f32.mrf.mxu0
          %v377 = vadd.f32 %v313, %v376
          %378 = vmatmul.f32.gmra.mxu0 %v329
          %v379 = vpop.f32.mrf.mxu0
          %v380 = vadd.f32 %v318, %v379
          %381 = vdwg.mxu0
          %382 = vst [vmem:[#allocation2] sm:$0xff] %v354
          %383 = vst [vmem:[#allocation2 + $0x8] sm:$0xff] %v377
          %384 = vst [vmem:[#allocation2 + $0x10] sm:$0x1f] %v357
          %385 = vst [vmem:[#allocation2 + $0x18] sm:$0x1f] %v380
        $region48: #{tpu_custom_call.1} parent=43 // pred_fallthru
          _
        %v386 = vld [vmem:[%s2] sm:$0xff]
        %v387 = vld [vmem:[%s293] sm:$0xff]
        %v388 = vld [vmem:[%s3] sm:$0xff]
        %390 = vset.pattern.permute.xlu0 0
        %391 = vperm.xlu0 %390, %v388
        %v392 = vpop.permute.xlu0 %391
        %395 = vst [vmem:[#allocation1] ss:$2 sm:$0xff] %v387
        %v396 = vld.sshfl [vmem:[#allocation1] sm:$0xff pattern:$0x75316420]
        %v397 = vld.sshfl [vmem:[#allocation1 + $0x8] sm:$0xff pattern:$0x75316420]
        %vm398 = vcmask 31744
        %v400 = vsel %vm398, %v386, 0
        %vm402 = vcmask 1043456
        %v403 = vsel %vm402, %v396, 0
        %v405 = vsel %vm402, %v397, 0
        %407 = vmatpush.msra.mxu0 0.0
        %408 = vmatpush.msra.mxu0 0.0
        %409 = vmatpush.msra.mxu0 0.0
        %410 = vmatpush.msra.mxu0 0.0
        %411 = vmatpush.msra.mxu0 0.0
        %412 = vmatpush.msra.mxu0 0.0
        %413 = vmatpush.msra.mxu0 0.0
        %414 = vmatpush.msra.mxu0 0.0
        %415 = vmatpush.msra.mxu0 0.0
        %416 = vmatpush.msra.mxu0 0.0
        %417 = vmatpush.msra.mxu0 0.0
        %418 = vmatpush.msra.mxu0 0.0
        %419 = vmatpush.msra.mxu0 0.0
        %420 = vmatpush.msra.mxu0 0.0
        %421 = vmatpush.msra.mxu0 0.0
        %422 = vmatpush.msra.mxu0 %v403
        %423 = vmatmul.f32.gmra.mxu0 %v400
        %v424 = vpop.f32.mrf.mxu0
        %v425 = vadd.f32 %v392, %v424
        %426 = vdwg.mxu0
        %427 = vmatpush.msra.mxu0 0.0
        %428 = vmatpush.msra.mxu0 0.0
        %429 = vmatpush.msra.mxu0 0.0
        %430 = vmatpush.msra.mxu0 0.0
        %431 = vmatpush.msra.mxu0 0.0
        %432 = vmatpush.msra.mxu0 0.0
        %433 = vmatpush.msra.mxu0 0.0
        %434 = vmatpush.msra.mxu0 0.0
        %435 = vmatpush.msra.mxu0 0.0
        %436 = vmatpush.msra.mxu0 0.0
        %437 = vmatpush.msra.mxu0 0.0
        %438 = vmatpush.msra.mxu0 0.0
        %439 = vmatpush.msra.mxu0 0.0
        %440 = vmatpush.msra.mxu0 0.0
        %441 = vmatpush.msra.mxu0 0.0
        %442 = vmatpush.msra.mxu0 %v405
        %443 = vmatmul.f32.gmra.mxu0 %v400
        %v444 = vpop.f32.mrf.mxu0
        %v445 = vadd.f32 %v392, %v444
        %446 = vdwg.mxu0
        %v447 = vld [vmem:[#allocation2] sm:$0xff]
        %v448 = vld [vmem:[#allocation2 + $0x8] sm:$0xff]
        %v449 = vld [vmem:[#allocation2 + $0x10] sm:$0x1f]
        %v450 = vld [vmem:[#allocation2 + $0x18] sm:$0x1f]
        %451 = vxpose.xlu0.b32.start [1/16] %v425, 128
        %452 = vxpose.xlu0.b32.cont [2/16] 0.0, 128
        %453 = vxpose.xlu0.b32.cont [3/16] 0.0, 128
        %454 = vxpose.xlu0.b32.cont [4/16] 0.0, 128
        %455 = vxpose.xlu0.b32.cont [5/16] 0.0, 128
        %456 = vxpose.xlu0.b32.cont [6/16] 0.0, 128
        %457 = vxpose.xlu0.b32.cont [7/16] 0.0, 128
        %458 = vxpose.xlu0.b32.cont [8/16] 0.0, 128
        %459 = vxpose.xlu0.b32.cont [9/16] 0.0, 128
        %460 = vxpose.xlu0.b32.cont [10/16] 0.0, 128
        %461 = vxpose.xlu0.b32.cont [11/16] 0.0, 128
        %462 = vxpose.xlu0.b32.cont [12/16] 0.0, 128
        %463 = vxpose.xlu0.b32.cont [13/16] 0.0, 128
        %464 = vxpose.xlu0.b32.cont [14/16] 0.0, 128
        %465 = vxpose.xlu0.b32.cont [15/16] 0.0, 128
        %466 = vxpose.xlu0.b32.end [16/16] 0.0, 128
        %v467 = vpop.trf.xlu0
        %v468 = vpop.trf.xlu0
        %v469 = vpop.trf.xlu0
        %v470 = vpop.trf.xlu0
        %v471 = vpop.trf.xlu0
        %v472 = vpop.trf.xlu0
        %v473 = vpop.trf.xlu0
        %v474 = vpop.trf.xlu0
        %v475 = vpop.trf.xlu0
        %v476 = vpop.trf.xlu0
        %v477 = vpop.trf.xlu0
        %v478 = vpop.trf.xlu0
        %v479 = vpop.trf.xlu0
        %v480 = vpop.trf.xlu0
        %v481 = vpop.trf.xlu0
        %v482 = vpop.trf.xlu0
        %483 = vxpose.xlu0.b32.start [1/16] %v445, 128
        %484 = vxpose.xlu0.b32.cont [2/16] 0.0, 128
        %485 = vxpose.xlu0.b32.cont [3/16] 0.0, 128
        %486 = vxpose.xlu0.b32.cont [4/16] 0.0, 128
        %487 = vxpose.xlu0.b32.cont [5/16] 0.0, 128
        %488 = vxpose.xlu0.b32.cont [6/16] 0.0, 128
        %489 = vxpose.xlu0.b32.cont [7/16] 0.0, 128
        %490 = vxpose.xlu0.b32.cont [8/16] 0.0, 128
        %491 = vxpose.xlu0.b32.cont [9/16] 0.0, 128
        %492 = vxpose.xlu0.b32.cont [10/16] 0.0, 128
        %493 = vxpose.xlu0.b32.cont [11/16] 0.0, 128
        %494 = vxpose.xlu0.b32.cont [12/16] 0.0, 128
        %495 = vxpose.xlu0.b32.cont [13/16] 0.0, 128
        %496 = vxpose.xlu0.b32.cont [14/16] 0.0, 128
        %497 = vxpose.xlu0.b32.cont [15/16] 0.0, 128
        %498 = vxpose.xlu0.b32.end [16/16] 0.0, 128
        %v499 = vpop.trf.xlu0
        %v500 = vpop.trf.xlu0
        %v501 = vpop.trf.xlu0
        %v502 = vpop.trf.xlu0
        %v503 = vpop.trf.xlu0
        %v504 = vpop.trf.xlu0
        %v505 = vpop.trf.xlu0
        %v506 = vpop.trf.xlu0
        %v507 = vpop.trf.xlu0
        %v508 = vpop.trf.xlu0
        %v509 = vpop.trf.xlu0
        %v510 = vpop.trf.xlu0
        %v511 = vpop.trf.xlu0
        %v512 = vpop.trf.xlu0
        %v513 = vpop.trf.xlu0
        %v514 = vpop.trf.xlu0
        %vm515 = vcmask 64512
        %v517 = vsel %vm515, %v467, 0
        %v520 = vsel %vm515, %v468, 0
        %v523 = vsel %vm515, %v469, 0
        %v526 = vsel %vm515, %v470, 0
        %v529 = vsel %vm515, %v471, 0
        %v532 = vsel %vm515, %v472, 0
        %v535 = vsel %vm515, %v473, 0
        %v538 = vsel %vm515, %v474, 0
        %v541 = vsel %vm515, %v475, 0
        %v544 = vsel %vm515, %v476, 0
        %v547 = vsel %vm515, %v477, 0
        %v550 = vsel %vm515, %v478, 0
        %v553 = vsel %vm515, %v479, 0
        %v556 = vsel %vm515, %v480, 0
        %v559 = vsel %vm515, %v481, 0
        %v562 = vsel %vm515, %v482, 0
        %v565 = vsel %vm515, %v499, 0
        %v568 = vsel %vm515, %v500, 0
        %v571 = vsel %vm515, %v501, 0
        %v574 = vsel %vm515, %v502, 0
        %v577 = vsel %vm515, %v503, 0
        %v580 = vsel %vm515, %v504, 0
        %v583 = vsel %vm515, %v505, 0
        %v586 = vsel %vm515, %v506, 0
        %v589 = vsel %vm515, %v507, 0
        %v592 = vsel %vm515, %v508, 0
        %v595 = vsel %vm515, %v509, 0
        %v598 = vsel %vm515, %v510, 0
        %v601 = vsel %vm515, %v511, 0
        %v604 = vsel %vm515, %v512, 0
        %v607 = vsel %vm515, %v513, 0
        %v610 = vsel %vm515, %v514, 0
        %612 = vmatpush.msra.mxu0 0.0
        %613 = vmatpush.msra.mxu0 0.0
        %614 = vmatpush.msra.mxu0 0.0
        %615 = vmatpush.msra.mxu0 0.0
        %616 = vmatpush.msra.mxu0 0.0
        %617 = vmatpush.msra.mxu0 0.0
        %618 = vmatpush.msra.mxu0 0.0
        %619 = vmatpush.msra.mxu0 0.0
        %620 = vmatpush.msra.mxu0 0.0
        %621 = vmatpush.msra.mxu0 0.0
        %622 = vmatpush.msra.mxu0 0.0
        %623 = vmatpush.msra.mxu0 0.0
        %624 = vmatpush.msra.mxu0 0.0
        %625 = vmatpush.msra.mxu0 0.0
        %626 = vmatpush.msra.mxu0 0.0
        %627 = vmatpush.msra.mxu0 %v447
        %628 = vmatmul.f32.gmra.mxu0 %v517
        %v629 = vpop.f32.mrf.mxu0
        %v630 = vadd.f32 0.0, %v629
        %631 = vmatmul.f32.gmra.mxu0 %v520
        %v632 = vpop.f32.mrf.mxu0
        %v633 = vadd.f32 0.0, %v632
        %634 = vmatmul.f32.gmra.mxu0 %v523
        %v635 = vpop.f32.mrf.mxu0
        %v636 = vadd.f32 0.0, %v635
        %637 = vmatmul.f32.gmra.mxu0 %v526
        %v638 = vpop.f32.mrf.mxu0
        %v639 = vadd.f32 0.0, %v638
        %640 = vmatmul.f32.gmra.mxu0 %v529
        %v641 = vpop.f32.mrf.mxu0
        %v642 = vadd.f32 0.0, %v641
        %643 = vmatmul.f32.gmra.mxu0 %v532
        %v644 = vpop.f32.mrf.mxu0
        %v645 = vadd.f32 0.0, %v644
        %646 = vmatmul.f32.gmra.mxu0 %v535
        %v647 = vpop.f32.mrf.mxu0
        %v648 = vadd.f32 0.0, %v647
        %649 = vmatmul.f32.gmra.mxu0 %v538
        %v650 = vpop.f32.mrf.mxu0
        %v651 = vadd.f32 0.0, %v650
        %652 = vmatmul.f32.gmra.mxu0 %v541
        %v653 = vpop.f32.mrf.mxu0
        %v654 = vadd.f32 0.0, %v653
        %655 = vmatmul.f32.gmra.mxu0 %v544
        %v656 = vpop.f32.mrf.mxu0
        %v657 = vadd.f32 0.0, %v656
        %658 = vmatmul.f32.gmra.mxu0 %v547
        %v659 = vpop.f32.mrf.mxu0
        %v660 = vadd.f32 0.0, %v659
        %661 = vmatmul.f32.gmra.mxu0 %v550
        %v662 = vpop.f32.mrf.mxu0
        %v663 = vadd.f32 0.0, %v662
        %664 = vmatmul.f32.gmra.mxu0 %v553
        %v665 = vpop.f32.mrf.mxu0
        %v666 = vadd.f32 0.0, %v665
        %667 = vmatmul.f32.gmra.mxu0 %v556
        %v668 = vpop.f32.mrf.mxu0
        %v669 = vadd.f32 0.0, %v668
        %670 = vmatmul.f32.gmra.mxu0 %v559
        %v671 = vpop.f32.mrf.mxu0
        %v672 = vadd.f32 0.0, %v671
        %673 = vmatmul.f32.gmra.mxu0 %v562
        %v674 = vpop.f32.mrf.mxu0
        %v675 = vadd.f32 0.0, %v674
        %676 = vmatmul.f32.gmra.mxu0 %v565
        %v677 = vpop.f32.mrf.mxu0
        %v678 = vadd.f32 0.0, %v677
        %679 = vmatmul.f32.gmra.mxu0 %v568
        %v680 = vpop.f32.mrf.mxu0
        %v681 = vadd.f32 0.0, %v680
        %682 = vmatmul.f32.gmra.mxu0 %v571
        %v683 = vpop.f32.mrf.mxu0
        %v684 = vadd.f32 0.0, %v683
        %685 = vmatmul.f32.gmra.mxu0 %v574
        %v686 = vpop.f32.mrf.mxu0
        %v687 = vadd.f32 0.0, %v686
        %688 = vmatmul.f32.gmra.mxu0 %v577
        %v689 = vpop.f32.mrf.mxu0
        %v690 = vadd.f32 0.0, %v689
        %691 = vmatmul.f32.gmra.mxu0 %v580
        %v692 = vpop.f32.mrf.mxu0
        %v693 = vadd.f32 0.0, %v692
        %694 = vmatmul.f32.gmra.mxu0 %v583
        %v695 = vpop.f32.mrf.mxu0
        %v696 = vadd.f32 0.0, %v695
        %697 = vmatmul.f32.gmra.mxu0 %v586
        %v698 = vpop.f32.mrf.mxu0
        %v699 = vadd.f32 0.0, %v698
        %700 = vmatmul.f32.gmra.mxu0 %v589
        %v701 = vpop.f32.mrf.mxu0
        %v702 = vadd.f32 0.0, %v701
        %703 = vmatmul.f32.gmra.mxu0 %v592
        %v704 = vpop.f32.mrf.mxu0
        %v705 = vadd.f32 0.0, %v704
        %706 = vmatmul.f32.gmra.mxu0 %v595
        %v707 = vpop.f32.mrf.mxu0
        %v708 = vadd.f32 0.0, %v707
        %709 = vmatmul.f32.gmra.mxu0 %v598
        %v710 = vpop.f32.mrf.mxu0
        %v711 = vadd.f32 0.0, %v710
        %712 = vmatmul.f32.gmra.mxu0 %v601
        %v713 = vpop.f32.mrf.mxu0
        %v714 = vadd.f32 0.0, %v713
        %715 = vmatmul.f32.gmra.mxu0 %v604
        %v716 = vpop.f32.mrf.mxu0
        %v717 = vadd.f32 0.0, %v716
        %718 = vmatmul.f32.gmra.mxu0 %v607
        %v719 = vpop.f32.mrf.mxu0
        %v720 = vadd.f32 0.0, %v719
        %721 = vmatmul.f32.gmra.mxu0 %v610
        %v722 = vpop.f32.mrf.mxu0
        %v723 = vadd.f32 0.0, %v722
        %724 = vdwg.mxu0
        %725 = vmatpush.msra.mxu0 0.0
        %726 = vmatpush.msra.mxu0 0.0
        %727 = vmatpush.msra.mxu0 0.0
        %728 = vmatpush.msra.mxu0 0.0
        %729 = vmatpush.msra.mxu0 0.0
        %730 = vmatpush.msra.mxu0 0.0
        %731 = vmatpush.msra.mxu0 0.0
        %732 = vmatpush.msra.mxu0 0.0
        %733 = vmatpush.msra.mxu0 0.0
        %734 = vmatpush.msra.mxu0 0.0
        %735 = vmatpush.msra.mxu0 0.0
        %736 = vmatpush.msra.mxu0 0.0
        %737 = vmatpush.msra.mxu0 0.0
        %738 = vmatpush.msra.mxu0 0.0
        %739 = vmatpush.msra.mxu0 0.0
        %740 = vmatpush.msra.mxu0 %v448
        %741 = vmatmul.f32.gmra.mxu0 %v517
        %v742 = vpop.f32.mrf.mxu0
        %v743 = vadd.f32 0.0, %v742
        %744 = vmatmul.f32.gmra.mxu0 %v520
        %v745 = vpop.f32.mrf.mxu0
        %v746 = vadd.f32 0.0, %v745
        %747 = vmatmul.f32.gmra.mxu0 %v523
        %v748 = vpop.f32.mrf.mxu0
        %v749 = vadd.f32 0.0, %v748
        %750 = vmatmul.f32.gmra.mxu0 %v526
        %v751 = vpop.f32.mrf.mxu0
        %v752 = vadd.f32 0.0, %v751
        %753 = vmatmul.f32.gmra.mxu0 %v529
        %v754 = vpop.f32.mrf.mxu0
        %v755 = vadd.f32 0.0, %v754
        %756 = vmatmul.f32.gmra.mxu0 %v532
        %v757 = vpop.f32.mrf.mxu0
        %v758 = vadd.f32 0.0, %v757
        %759 = vmatmul.f32.gmra.mxu0 %v535
        %v760 = vpop.f32.mrf.mxu0
        %v761 = vadd.f32 0.0, %v760
        %762 = vmatmul.f32.gmra.mxu0 %v538
        %v763 = vpop.f32.mrf.mxu0
        %v764 = vadd.f32 0.0, %v763
        %765 = vmatmul.f32.gmra.mxu0 %v541
        %v766 = vpop.f32.mrf.mxu0
        %v767 = vadd.f32 0.0, %v766
        %768 = vmatmul.f32.gmra.mxu0 %v544
        %v769 = vpop.f32.mrf.mxu0
        %v770 = vadd.f32 0.0, %v769
        %771 = vmatmul.f32.gmra.mxu0 %v547
        %v772 = vpop.f32.mrf.mxu0
        %v773 = vadd.f32 0.0, %v772
        %774 = vmatmul.f32.gmra.mxu0 %v550
        %v775 = vpop.f32.mrf.mxu0
        %v776 = vadd.f32 0.0, %v775
        %777 = vmatmul.f32.gmra.mxu0 %v553
        %v778 = vpop.f32.mrf.mxu0
        %v779 = vadd.f32 0.0, %v778
        %780 = vmatmul.f32.gmra.mxu0 %v556
        %v781 = vpop.f32.mrf.mxu0
        %v782 = vadd.f32 0.0, %v781
        %783 = vmatmul.f32.gmra.mxu0 %v559
        %v784 = vpop.f32.mrf.mxu0
        %v785 = vadd.f32 0.0, %v784
        %786 = vmatmul.f32.gmra.mxu0 %v562
        %v787 = vpop.f32.mrf.mxu0
        %v788 = vadd.f32 0.0, %v787
        %789 = vmatmul.f32.gmra.mxu0 %v565
        %v790 = vpop.f32.mrf.mxu0
        %v791 = vadd.f32 0.0, %v790
        %792 = vmatmul.f32.gmra.mxu0 %v568
        %v793 = vpop.f32.mrf.mxu0
        %v794 = vadd.f32 0.0, %v793
        %795 = vmatmul.f32.gmra.mxu0 %v571
        %v796 = vpop.f32.mrf.mxu0
        %v797 = vadd.f32 0.0, %v796
        %798 = vmatmul.f32.gmra.mxu0 %v574
        %v799 = vpop.f32.mrf.mxu0
        %v800 = vadd.f32 0.0, %v799
        %801 = vmatmul.f32.gmra.mxu0 %v577
        %v802 = vpop.f32.mrf.mxu0
        %v803 = vadd.f32 0.0, %v802
        %804 = vmatmul.f32.gmra.mxu0 %v580
        %v805 = vpop.f32.mrf.mxu0
        %v806 = vadd.f32 0.0, %v805
        %807 = vmatmul.f32.gmra.mxu0 %v583
        %v808 = vpop.f32.mrf.mxu0
        %v809 = vadd.f32 0.0, %v808
        %810 = vmatmul.f32.gmra.mxu0 %v586
        %v811 = vpop.f32.mrf.mxu0
        %v812 = vadd.f32 0.0, %v811
        %813 = vmatmul.f32.gmra.mxu0 %v589
        %v814 = vpop.f32.mrf.mxu0
        %v815 = vadd.f32 0.0, %v814
        %816 = vmatmul.f32.gmra.mxu0 %v592
        %v817 = vpop.f32.mrf.mxu0
        %v818 = vadd.f32 0.0, %v817
        %819 = vmatmul.f32.gmra.mxu0 %v595
        %v820 = vpop.f32.mrf.mxu0
        %v821 = vadd.f32 0.0, %v820
        %822 = vmatmul.f32.gmra.mxu0 %v598
        %v823 = vpop.f32.mrf.mxu0
        %v824 = vadd.f32 0.0, %v823
        %825 = vmatmul.f32.gmra.mxu0 %v601
        %v826 = vpop.f32.mrf.mxu0
        %v827 = vadd.f32 0.0, %v826
        %828 = vmatmul.f32.gmra.mxu0 %v604
        %v829 = vpop.f32.mrf.mxu0
        %v830 = vadd.f32 0.0, %v829
        %831 = vmatmul.f32.gmra.mxu0 %v607
        %v832 = vpop.f32.mrf.mxu0
        %v833 = vadd.f32 0.0, %v832
        %834 = vmatmul.f32.gmra.mxu0 %v610
        %v835 = vpop.f32.mrf.mxu0
        %v836 = vadd.f32 0.0, %v835
        %837 = vdwg.mxu0
        %v838 = vmax.f32 %v630, %v743
        %839 = vmax.xlane.f32.xlu0 %v838
        %v840 = vpop.xlane.xlu0 %839
        %v841 = vmax.f32 %v633, %v746
        %842 = vmax.xlane.f32.xlu0 %v841
        %v843 = vpop.xlane.xlu0 %842
        %v844 = vmax.f32 %v636, %v749
        %845 = vmax.xlane.f32.xlu0 %v844
        %v846 = vpop.xlane.xlu0 %845
        %v847 = vmax.f32 %v639, %v752
        %848 = vmax.xlane.f32.xlu0 %v847
        %v849 = vpop.xlane.xlu0 %848
        %v850 = vmax.f32 %v642, %v755
        %851 = vmax.xlane.f32.xlu0 %v850
        %v852 = vpop.xlane.xlu0 %851
        %v853 = vmax.f32 %v645, %v758
        %854 = vmax.xlane.f32.xlu0 %v853
        %v855 = vpop.xlane.xlu0 %854
        %v856 = vmax.f32 %v648, %v761
        %857 = vmax.xlane.f32.xlu0 %v856
        %v858 = vpop.xlane.xlu0 %857
        %v859 = vmax.f32 %v651, %v764
        %860 = vmax.xlane.f32.xlu0 %v859
        %v861 = vpop.xlane.xlu0 %860
        %v862 = vmax.f32 %v654, %v767
        %863 = vmax.xlane.f32.xlu0 %v862
        %v864 = vpop.xlane.xlu0 %863
        %v865 = vmax.f32 %v657, %v770
        %866 = vmax.xlane.f32.xlu0 %v865
        %v867 = vpop.xlane.xlu0 %866
        %v868 = vmax.f32 %v660, %v773
        %869 = vmax.xlane.f32.xlu0 %v868
        %v870 = vpop.xlane.xlu0 %869
        %v871 = vmax.f32 %v663, %v776
        %872 = vmax.xlane.f32.xlu0 %v871
        %v873 = vpop.xlane.xlu0 %872
        %v874 = vmax.f32 %v666, %v779
        %875 = vmax.xlane.f32.xlu0 %v874
        %v876 = vpop.xlane.xlu0 %875
        %v877 = vmax.f32 %v669, %v782
        %878 = vmax.xlane.f32.xlu0 %v877
        %v879 = vpop.xlane.xlu0 %878
        %v880 = vmax.f32 %v672, %v785
        %881 = vmax.xlane.f32.xlu0 %v880
        %v882 = vpop.xlane.xlu0 %881
        %v883 = vmax.f32 %v675, %v788
        %884 = vmax.xlane.f32.xlu0 %v883
        %v885 = vpop.xlane.xlu0 %884
        %v886 = vmax.f32 %v678, %v791
        %887 = vmax.xlane.f32.xlu0 %v886
        %v888 = vpop.xlane.xlu0 %887
        %v889 = vmax.f32 %v681, %v794
        %890 = vmax.xlane.f32.xlu0 %v889
        %v891 = vpop.xlane.xlu0 %890
        %v892 = vmax.f32 %v684, %v797
        %893 = vmax.xlane.f32.xlu0 %v892
        %v894 = vpop.xlane.xlu0 %893
        %v895 = vmax.f32 %v687, %v800
        %896 = vmax.xlane.f32.xlu0 %v895
        %v897 = vpop.xlane.xlu0 %896
        %v898 = vmax.f32 %v690, %v803
        %899 = vmax.xlane.f32.xlu0 %v898
        %v900 = vpop.xlane.xlu0 %899
        %v901 = vmax.f32 %v693, %v806
        %902 = vmax.xlane.f32.xlu0 %v901
        %v903 = vpop.xlane.xlu0 %902
        %v904 = vmax.f32 %v696, %v809
        %905 = vmax.xlane.f32.xlu0 %v904
        %v906 = vpop.xlane.xlu0 %905
        %v907 = vmax.f32 %v699, %v812
        %908 = vmax.xlane.f32.xlu0 %v907
        %v909 = vpop.xlane.xlu0 %908
        %v910 = vmax.f32 %v702, %v815
        %911 = vmax.xlane.f32.xlu0 %v910
        %v912 = vpop.xlane.xlu0 %911
        %v913 = vmax.f32 %v705, %v818
        %914 = vmax.xlane.f32.xlu0 %v913
        %v915 = vpop.xlane.xlu0 %914
        %v916 = vmax.f32 %v708, %v821
        %917 = vmax.xlane.f32.xlu0 %v916
        %v918 = vpop.xlane.xlu0 %917
        %v919 = vmax.f32 %v711, %v824
        %920 = vmax.xlane.f32.xlu0 %v919
        %v921 = vpop.xlane.xlu0 %920
        %v922 = vmax.f32 %v714, %v827
        %923 = vmax.xlane.f32.xlu0 %v922
        %v924 = vpop.xlane.xlu0 %923
        %v925 = vmax.f32 %v717, %v830
        %926 = vmax.xlane.f32.xlu0 %v925
        %v927 = vpop.xlane.xlu0 %926
        %v928 = vmax.f32 %v720, %v833
        %929 = vmax.xlane.f32.xlu0 %v928
        %v930 = vpop.xlane.xlu0 %929
        %v931 = vmax.f32 %v723, %v836
        %932 = vmax.xlane.f32.xlu0 %v931
        %v933 = vpop.xlane.xlu0 %932
        %v934 = vsub.f32 %v630, %v840
        %v935 = vsub.f32 %v743, %v840
        %v936 = vsub.f32 %v633, %v843
        %v937 = vsub.f32 %v746, %v843
        %v938 = vsub.f32 %v636, %v846
        %v939 = vsub.f32 %v749, %v846
        %v940 = vsub.f32 %v639, %v849
        %v941 = vsub.f32 %v752, %v849
        %v942 = vsub.f32 %v642, %v852
        %v943 = vsub.f32 %v755, %v852
        %v944 = vsub.f32 %v645, %v855
        %v945 = vsub.f32 %v758, %v855
        %v946 = vsub.f32 %v648, %v858
        %v947 = vsub.f32 %v761, %v858
        %v948 = vsub.f32 %v651, %v861
        %v949 = vsub.f32 %v764, %v861
        %v950 = vsub.f32 %v654, %v864
        %v951 = vsub.f32 %v767, %v864
        %v952 = vsub.f32 %v657, %v867
        %v953 = vsub.f32 %v770, %v867
        %v954 = vsub.f32 %v660, %v870
        %v955 = vsub.f32 %v773, %v870
        %v956 = vsub.f32 %v663, %v873
        %v957 = vsub.f32 %v776, %v873
        %v958 = vsub.f32 %v666, %v876
        %v959 = vsub.f32 %v779, %v876
        %v960 = vsub.f32 %v669, %v879
        %v961 = vsub.f32 %v782, %v879
        %v962 = vsub.f32 %v672, %v882
        %v963 = vsub.f32 %v785, %v882
        %v964 = vsub.f32 %v675, %v885
        %v965 = vsub.f32 %v788, %v885
        %v966 = vsub.f32 %v678, %v888
        %v967 = vsub.f32 %v791, %v888
        %v968 = vsub.f32 %v681, %v891
        %v969 = vsub.f32 %v794, %v891
        %v970 = vsub.f32 %v684, %v894
        %v971 = vsub.f32 %v797, %v894
        %v972 = vsub.f32 %v687, %v897
        %v973 = vsub.f32 %v800, %v897
        %v974 = vsub.f32 %v690, %v900
        %v975 = vsub.f32 %v803, %v900
        %v976 = vsub.f32 %v693, %v903
        %v977 = vsub.f32 %v806, %v903
        %v978 = vsub.f32 %v696, %v906
        %v979 = vsub.f32 %v809, %v906
        %v980 = vsub.f32 %v699, %v909
        %v981 = vsub.f32 %v812, %v909
        %v982 = vsub.f32 %v702, %v912
        %v983 = vsub.f32 %v815, %v912
        %v984 = vsub.f32 %v705, %v915
        %v985 = vsub.f32 %v818, %v915
        %v986 = vsub.f32 %v708, %v918
        %v987 = vsub.f32 %v821, %v918
        %v988 = vsub.f32 %v711, %v921
        %v989 = vsub.f32 %v824, %v921
        %v990 = vsub.f32 %v714, %v924
        %v991 = vsub.f32 %v827, %v924
        %v992 = vsub.f32 %v717, %v927
        %v993 = vsub.f32 %v830, %v927
        %v994 = vsub.f32 %v720, %v930
        %v995 = vsub.f32 %v833, %v930
        %v996 = vsub.f32 %v723, %v933
        %v997 = vsub.f32 %v836, %v933
        %v998 = vmul.f32 %v934, 1.442695
        %v999 = vpow.pop %v998
        %v1000 = vmul.f32 %v935, 1.442695
        %v1001 = vpow.pop %v1000
        %v1002 = vmul.f32 %v936, 1.442695
        %v1003 = vpow.pop %v1002
        %v1004 = vmul.f32 %v937, 1.442695
        %v1005 = vpow.pop %v1004
        %v1006 = vmul.f32 %v938, 1.442695
        %v1007 = vpow.pop %v1006
        %v1008 = vmul.f32 %v939, 1.442695
        %v1009 = vpow.pop %v1008
        %v1010 = vmul.f32 %v940, 1.442695
        %v1011 = vpow.pop %v1010
        %v1012 = vmul.f32 %v941, 1.442695
        %v1013 = vpow.pop %v1012
        %v1014 = vmul.f32 %v942, 1.442695
        %v1015 = vpow.pop %v1014
        %v1016 = vmul.f32 %v943, 1.442695
        %v1017 = vpow.pop %v1016
        %v1018 = vmul.f32 %v944, 1.442695
        %v1019 = vpow.pop %v1018
        %v1020 = vmul.f32 %v945, 1.442695
        %v1021 = vpow.pop %v1020
        %v1022 = vmul.f32 %v946, 1.442695
        %v1023 = vpow.pop %v1022
        %v1024 = vmul.f32 %v947, 1.442695
        %v1025 = vpow.pop %v1024
        %v1026 = vmul.f32 %v948, 1.442695
        %v1027 = vpow.pop %v1026
        %v1028 = vmul.f32 %v949, 1.442695
        %v1029 = vpow.pop %v1028
        %v1030 = vmul.f32 %v950, 1.442695
        %v1031 = vpow.pop %v1030
        %v1032 = vmul.f32 %v951, 1.442695
        %v1033 = vpow.pop %v1032
        %v1034 = vmul.f32 %v952, 1.442695
        %v1035 = vpow.pop %v1034
        %v1036 = vmul.f32 %v953, 1.442695
        %v1037 = vpow.pop %v1036
        %v1038 = vmul.f32 %v954, 1.442695
        %v1039 = vpow.pop %v1038
        %v1040 = vmul.f32 %v955, 1.442695
        %v1041 = vpow.pop %v1040
        %v1042 = vmul.f32 %v956, 1.442695
        %v1043 = vpow.pop %v1042
        %v1044 = vmul.f32 %v957, 1.442695
        %v1045 = vpow.pop %v1044
        %v1046 = vmul.f32 %v958, 1.442695
        %v1047 = vpow.pop %v1046
        %v1048 = vmul.f32 %v959, 1.442695
        %v1049 = vpow.pop %v1048
        %v1050 = vmul.f32 %v960, 1.442695
        %v1051 = vpow.pop %v1050
        %v1052 = vmul.f32 %v961, 1.442695
        %v1053 = vpow.pop %v1052
        %v1054 = vmul.f32 %v962, 1.442695
        %v1055 = vpow.pop %v1054
        %v1056 = vmul.f32 %v963, 1.442695
        %v1057 = vpow.pop %v1056
        %v1058 = vmul.f32 %v964, 1.442695
        %v1059 = vpow.pop %v1058
        %v1060 = vmul.f32 %v965, 1.442695
        %v1061 = vpow.pop %v1060
        %v1062 = vmul.f32 %v966, 1.442695
        %v1063 = vpow.pop %v1062
        %v1064 = vmul.f32 %v967, 1.442695
        %v1065 = vpow.pop %v1064
        %v1066 = vmul.f32 %v968, 1.442695
        %v1067 = vpow.pop %v1066
        %v1068 = vmul.f32 %v969, 1.442695
        %v1069 = vpow.pop %v1068
        %v1070 = vmul.f32 %v970, 1.442695
        %v1071 = vpow.pop %v1070
        %v1072 = vmul.f32 %v971, 1.442695
        %v1073 = vpow.pop %v1072
        %v1074 = vmul.f32 %v972, 1.442695
        %v1075 = vpow.pop %v1074
        %v1076 = vmul.f32 %v973, 1.442695
        %v1077 = vpow.pop %v1076
        %v1078 = vmul.f32 %v974, 1.442695
        %v1079 = vpow.pop %v1078
        %v1080 = vmul.f32 %v975, 1.442695
        %v1081 = vpow.pop %v1080
        %v1082 = vmul.f32 %v976, 1.442695
        %v1083 = vpow.pop %v1082
        %v1084 = vmul.f32 %v977, 1.442695
        %v1085 = vpow.pop %v1084
        %v1086 = vmul.f32 %v978, 1.442695
        %v1087 = vpow.pop %v1086
        %v1088 = vmul.f32 %v979, 1.442695
        %v1089 = vpow.pop %v1088
        %v1090 = vmul.f32 %v980, 1.442695
        %v1091 = vpow.pop %v1090
        %v1092 = vmul.f32 %v981, 1.442695
        %v1093 = vpow.pop %v1092
        %v1094 = vmul.f32 %v982, 1.442695
        %v1095 = vpow.pop %v1094
        %v1096 = vmul.f32 %v983, 1.442695
        %v1097 = vpow.pop %v1096
        %v1098 = vmul.f32 %v984, 1.442695
        %v1099 = vpow.pop %v1098
        %v1100 = vmul.f32 %v985, 1.442695
        %v1101 = vpow.pop %v1100
        %v1102 = vmul.f32 %v986, 1.442695
        %v1103 = vpow.pop %v1102
        %v1104 = vmul.f32 %v987, 1.442695
        %v1105 = vpow.pop %v1104
        %v1106 = vmul.f32 %v988, 1.442695
        %v1107 = vpow.pop %v1106
        %v1108 = vmul.f32 %v989, 1.442695
        %v1109 = vpow.pop %v1108
        %v1110 = vmul.f32 %v990, 1.442695
        %v1111 = vpow.pop %v1110
        %v1112 = vmul.f32 %v991, 1.442695
        %v1113 = vpow.pop %v1112
        %v1114 = vmul.f32 %v992, 1.442695
        %v1115 = vpow.pop %v1114
        %v1116 = vmul.f32 %v993, 1.442695
        %v1117 = vpow.pop %v1116
        %v1118 = vmul.f32 %v994, 1.442695
        %v1119 = vpow.pop %v1118
        %v1120 = vmul.f32 %v995, 1.442695
        %v1121 = vpow.pop %v1120
        %v1122 = vmul.f32 %v996, 1.442695
        %v1123 = vpow.pop %v1122
        %v1124 = vmul.f32 %v997, 1.442695
        %v1125 = vpow.pop %v1124
        %1126 = vmatpush.xpose.msra.mxu0 %v1059
        %1127 = vmatpush.xpose.msra.mxu0 %v1055
        %1128 = vmatpush.xpose.msra.mxu0 %v1051
        %1129 = vmatpush.xpose.msra.mxu0 %v1047
        %1130 = vmatpush.xpose.msra.mxu0 %v1043
        %1131 = vmatpush.xpose.msra.mxu0 %v1039
        %1132 = vmatpush.xpose.msra.mxu0 %v1035
        %1133 = vmatpush.xpose.msra.mxu0 %v1031
        %1134 = vmatpush.xpose.msra.mxu0 %v1027
        %1135 = vmatpush.xpose.msra.mxu0 %v1023
        %1136 = vmatpush.xpose.msra.mxu0 %v1019
        %1137 = vmatpush.xpose.msra.mxu0 %v1015
        %1138 = vmatpush.xpose.msra.mxu0 %v1011
        %1139 = vmatpush.xpose.msra.mxu0 %v1007
        %1140 = vmatpush.xpose.msra.mxu0 %v1003
        %1141 = vmatpush.xpose.msra.mxu0 %v999
        %1142 = vmatmul.f32.gmra.mxu0 %v449
        %v1143 = vpop.f32.mrf.mxu0
        %v1144 = vadd.f32 0.0, %v1143
        %1145 = vdwg.mxu0
        %1146 = vmatpush.xpose.msra.mxu0 %v1061
        %1147 = vmatpush.xpose.msra.mxu0 %v1057
        %1148 = vmatpush.xpose.msra.mxu0 %v1053
        %1149 = vmatpush.xpose.msra.mxu0 %v1049
        %1150 = vmatpush.xpose.msra.mxu0 %v1045
        %1151 = vmatpush.xpose.msra.mxu0 %v1041
        %1152 = vmatpush.xpose.msra.mxu0 %v1037
        %1153 = vmatpush.xpose.msra.mxu0 %v1033
        %1154 = vmatpush.xpose.msra.mxu0 %v1029
        %1155 = vmatpush.xpose.msra.mxu0 %v1025
        %1156 = vmatpush.xpose.msra.mxu0 %v1021
        %1157 = vmatpush.xpose.msra.mxu0 %v1017
        %1158 = vmatpush.xpose.msra.mxu0 %v1013
        %1159 = vmatpush.xpose.msra.mxu0 %v1009
        %1160 = vmatpush.xpose.msra.mxu0 %v1005
        %1161 = vmatpush.xpose.msra.mxu0 %v1001
        %1162 = vmatmul.f32.gmra.mxu0 %v450
        %v1163 = vpop.f32.mrf.mxu0
        %v1164 = vadd.f32 %v1144, %v1163
        %1165 = vdwg.mxu0
        %1166 = vmatpush.xpose.msra.mxu0 %v1123
        %1167 = vmatpush.xpose.msra.mxu0 %v1119
        %1168 = vmatpush.xpose.msra.mxu0 %v1115
        %1169 = vmatpush.xpose.msra.mxu0 %v1111
        %1170 = vmatpush.xpose.msra.mxu0 %v1107
        %1171 = vmatpush.xpose.msra.mxu0 %v1103
        %1172 = vmatpush.xpose.msra.mxu0 %v1099
        %1173 = vmatpush.xpose.msra.mxu0 %v1095
        %1174 = vmatpush.xpose.msra.mxu0 %v1091
        %1175 = vmatpush.xpose.msra.mxu0 %v1087
        %1176 = vmatpush.xpose.msra.mxu0 %v1083
        %1177 = vmatpush.xpose.msra.mxu0 %v1079
        %1178 = vmatpush.xpose.msra.mxu0 %v1075
        %1179 = vmatpush.xpose.msra.mxu0 %v1071
        %1180 = vmatpush.xpose.msra.mxu0 %v1067
        %1181 = vmatpush.xpose.msra.mxu0 %v1063
        %1182 = vmatmul.f32.gmra.mxu0 %v449
        %v1183 = vpop.f32.mrf.mxu0
        %v1184 = vadd.f32 0.0, %v1183
        %1185 = vdwg.mxu0
        %1186 = vmatpush.xpose.msra.mxu0 %v1125
        %1187 = vmatpush.xpose.msra.mxu0 %v1121
        %1188 = vmatpush.xpose.msra.mxu0 %v1117
        %1189 = vmatpush.xpose.msra.mxu0 %v1113
        %1190 = vmatpush.xpose.msra.mxu0 %v1109
        %1191 = vmatpush.xpose.msra.mxu0 %v1105
        %1192 = vmatpush.xpose.msra.mxu0 %v1101
        %1193 = vmatpush.xpose.msra.mxu0 %v1097
        %1194 = vmatpush.xpose.msra.mxu0 %v1093
        %1195 = vmatpush.xpose.msra.mxu0 %v1089
        %1196 = vmatpush.xpose.msra.mxu0 %v1085
        %1197 = vmatpush.xpose.msra.mxu0 %v1081
        %1198 = vmatpush.xpose.msra.mxu0 %v1077
        %1199 = vmatpush.xpose.msra.mxu0 %v1073
        %1200 = vmatpush.xpose.msra.mxu0 %v1069
        %1201 = vmatpush.xpose.msra.mxu0 %v1065
        %1202 = vmatmul.f32.gmra.mxu0 %v450
        %v1203 = vpop.f32.mrf.mxu0
        %v1204 = vadd.f32 %v1184, %v1203
        %1205 = vdwg.mxu0
        %v1206 = vrcp.pop %v1164
        %v1207 = vrcp.pop %v1204
        %v1208 = vperm.slane %v1206, 4
        %v1209 = vperm.slane %v1207, 4
        %v1210 = vmul.f32 %v1164, %v1208
        %v1211 = vmul.f32 %v1204, %v1209
        %v1214 = vrot.slane %v1211, 4
        %v1215 = vsel %vm402, %v1210, %v1214
        %1217 = vst [vmem:[%s284] sm:$0xff] %v1215
        %s1218 = sand.u32 %s180, 1
        %s1219 = scalar_lea.sflag [#allocation4], %s1218
        %s1220 = sand.u32 %s180, 1
        %s1221 = smul.addr %s1220, 8
        %s1222 = scalar_lea.vmem [#allocation3], %s1221
        // Predicated region
        $region49: #{tpu_custom_call.1} parent=43 // pred_check
          %p1223 = pneg %p190
        $region50: #{tpu_custom_call.1} parent=43 // pred_check_branch
          %1225 = sbr.rel (%p1223) target = $region52
        $region51: #{tpu_custom_call.1} parent=43 // pred_region
          %s1226 = smul.u32 2, %s25
          %1228 = vsyncadd %s1219, 0
          %s1229 = smul.addr %s24, 2
          %s1230 = sadd.s32 %s1226, %s1229
          %s1231 = smul.addr %s1230, 4
          %s1232 = scalar_lea.hbm %s6, %s1231
          %s1234 = sshll.u32 %s1222, 4
          %s1235 = int_to_ptr.vmem [resolvable:$true] %s1234
          %s1236 = sshll.u32 %s1232, 4
          %s1237 = int_to_ptr.hbm [resolvable:$true] %s1236
          %1239 = dma.vmem_to_hbm [thread:$0]  %s1235, 128, %s1237, %s1219
        $region52: #{tpu_custom_call.1} parent=43 // pred_fallthru
          _
      $region44: #{tpu_custom_call.1} parent=5 // pred_fallthru
        _
      %p1240 = scmp.le.s32.totalorder 2, %s15
      // Predicated region
      $region53: #{tpu_custom_call.1} parent=5 // pred_check
        %p1241 = pneg %p1240
      $region54: #{tpu_custom_call.1} parent=5 // pred_check_branch
        %1243 = sbr.rel (%p1241) target = $region56
      $region55: #{tpu_custom_call.1} parent=5 // pred_region
        %s1244 = ssub.s32 %s15, 2
        // Predicated region
        $region57: #{tpu_custom_call.1} parent=55 // pred_check
          %p1245 = pneg %p196
        $region58: #{tpu_custom_call.1} parent=55 // pred_check_branch
          %1247 = sbr.rel (%p1245) target = $region60
        $region59: #{tpu_custom_call.1} parent=55 // pred_region
          %s1248 = sand.u32 %s181, 1
          %s1249 = scalar_lea.sflag [#allocation4], %s1248
          %s1250 = sand.u32 %s181, 1
          %s1251 = smul.addr %s1250, 8
          %s1252 = scalar_lea.vmem [#allocation3], %s1251
          %1254 = dma.done %s1249, 128
        $region60: #{tpu_custom_call.1} parent=55 // pred_fallthru
          _
      $region56: #{tpu_custom_call.1} parent=5 // pred_fallthru
        _
    $region6: #{tpu_custom_call.1} parent=1 // loop_footer
      %s19 = sadd.s32 1, %s15
    $region7: #{tpu_custom_call.1} parent=1 // loop_footer_branch
      %14 = sbr.rel target = $region3
    $region8: #{tpu_custom_call.1} parent=1 // loop_exit
      _
    %1255 = vsyncpa [#allocation4], 1
    %s1256 = scalar_lea.sflag [#allocation4], 1
    %1257 = vsyncpa %s1256, 1

</llo_original>
